<compile_context>
chip_gen: v7x
topology: tpu7x:2x2x1
jax: 0.10.0
libtpu: 0.0.40
codegen_flags: <defaults>
</compile_context>

<pallas_src>
import functools

import jax
import jax.numpy as jnp
from jax.experimental import pallas as pl
from jax.experimental.pallas import tpu as pltpu


def _actor_critic_kernel(
    x_ref,                       # [tb, I]        bf16
    w_aff_ref, b_aff_ref,        # [I, Hp] bf16, [1, Hp] f32
    w_branch_ref, b_branch_ref,  # [Hp, 2Hp] bf16, [1, 2Hp] f32   (actor | critic fused)
    w_head_ref, b_head_ref,      # [2Hp, OUT_W] bf16, [1, OUT_W] f32 (action | value fused)
    out_ref,                     # [tb, OUT_W] f32: lanes [0,O) = probs, lane O = value, rest 0
    *, num_actions,
):
    # state = relu(affine(state)); dropout -> identity (eval mode)
    # TODO(synk): training-mode dropout (p=0.5) not implemented; eval-mode identity used.
    h = jnp.dot(x_ref[...], w_aff_ref[...], preferred_element_type=jnp.float32)
    h = jnp.maximum(h + b_aff_ref[...], 0.0)                       # [tb, Hp] f32

    # fused actor/critic branch: [tb,Hp] x [Hp,2Hp] -> [tb,2Hp]
    branch = jnp.dot(h.astype(jnp.bfloat16), w_branch_ref[...],
                     preferred_element_type=jnp.float32)
    branch = jnp.maximum(branch + b_branch_ref[...], 0.0)          # [av | cv]

    # fused action/value head lands directly in the lane-dense output tile:
    # lanes [0,O) = logits, lane O = state value, lanes > O = 0.
    head = jnp.dot(branch.astype(jnp.bfloat16), w_head_ref[...],
                   preferred_element_type=jnp.float32) + b_head_ref[...]

    # masked softmax over the logit lanes only (exact division).
    lane = jax.lax.broadcasted_iota(jnp.int32, head.shape, 1)
    is_logit = lane < num_actions
    masked = jnp.where(is_logit, head, jnp.float32(-1e30))
    m = jnp.max(masked, axis=-1, keepdims=True)
    e = jnp.where(is_logit, jnp.exp(masked - m), 0.0)
    probs = e / jnp.sum(e, axis=-1, keepdims=True)

    # one lane-dense, unmasked store: [probs | value | zeros]
    out_ref[...] = jnp.where(is_logit, probs, head)


def actor_critic_forward(x, params, *, tile_b=2048):
    """ActorCritic forward hot path (5 linears, ReLUs, softmax) in one kernel.

    Args:
      x: [B, input_dim] float32 state batch.
      params: dict of weights/biases (PyTorch Linear convention, W: [out, in]).
      tile_b: max batch rows per grid step (weights stay VMEM-resident).

    Returns:
      probs: [B, output_dim] action probabilities
      value: [B, 1] state values
    """
    B, I = x.shape
    H = params["w_aff"].shape[0]
    O = params["w_action"].shape[0]

    LANES = 128

    def _round_up(a, m):
        return ((a + m - 1) // m) * m

    Hp = _round_up(max(H, 1), LANES)          # hidden dim padded to lane width
    OUT_W = _round_up(O + 1, LANES)           # packed output: probs | value | 0

    def pad_to(a, shape):
        return jnp.pad(a, [(0, s - d) for s, d in zip(shape, a.shape)])

    # --- one-time layout plumbing (outside the kernel) ----------------------
    # affine
    w_aff = pad_to(params["w_aff"].T, (I, Hp)).astype(jnp.bfloat16)
    b_aff = pad_to(params["b_aff"], (1, Hp)).astype(jnp.float32)

    # fused actor|critic branch: [Hp, 2Hp]
    w_branch = jnp.concatenate(
        [pad_to(params["w_act_aff"].T, (Hp, Hp)),
         pad_to(params["w_crit"].T, (Hp, Hp))], axis=1).astype(jnp.bfloat16)
    b_branch = jnp.concatenate(
        [pad_to(params["b_act_aff"], (1, Hp)),
         pad_to(params["b_crit"], (1, Hp))], axis=1).astype(jnp.float32)

    # fused action|value head: [2Hp, OUT_W]
    w_head = jnp.zeros((2 * Hp, OUT_W), jnp.float32)
    w_head = w_head.at[:H, :O].set(params["w_action"].T)          # av -> logits
    w_head = w_head.at[Hp:Hp + H, O:O + 1].set(params["w_val"].T)  # cv -> value
    w_head = w_head.astype(jnp.bfloat16)
    b_head = jnp.zeros((1, OUT_W), jnp.float32)
    b_head = b_head.at[:, :O].set(params["b_action"][0])
    b_head = b_head.at[:, O:O + 1].set(params["b_val"][0])

    # --- batch tiling --------------------------------------------------------
    B_round = _round_up(B, 8)
    tb_cap = max(8, (tile_b // 8) * 8)
    if B_round >= 16:
        # keep >= 2 grid steps when possible (v7x has 2 TensorCores)
        tb = min(tb_cap, _round_up((B_round + 1) // 2, 8))
    else:
        tb = 8
    B_pad = _round_up(B_round, tb)
    if B_pad != B:
        x = jnp.pad(x, ((0, B_pad - B), (0, 0)))
    x = x.astype(jnp.bfloat16)
    grid = (B_pad // tb,)

    x_spec = pl.BlockSpec((tb, I), lambda i: (i, 0))
    out_spec = pl.BlockSpec((tb, OUT_W), lambda i: (i, 0))

    def resident(shape):
        # Same block every grid step -> stays resident in VMEM (no re-DMA).
        return pl.BlockSpec(shape, lambda i: (0, 0))

    kernel = functools.partial(_actor_critic_kernel, num_actions=O)

    packed = pl.pallas_call(
        kernel,
        out_shape=jax.ShapeDtypeStruct((B_pad, OUT_W), jnp.float32),
        grid=grid,
        in_specs=[
            x_spec,
            resident((I, Hp)), resident((1, Hp)),
            resident((Hp, 2 * Hp)), resident((1, 2 * Hp)),
            resident((2 * Hp, OUT_W)), resident((1, OUT_W)),
        ],
        out_specs=out_spec,
        compiler_params=pltpu.CompilerParams(
            dimension_semantics=("parallel",)),
    )(x, w_aff, b_aff, w_branch, b_branch, w_head, b_head)

    probs = packed[:B, :O]
    value = packed[:B, O:O + 1]
    return probs, value


def init_params(key, input_dim, hidden_dim, output_dim):
    ks = jax.random.split(key, 10)

    def linear(kw, kb, out_f, in_f):
        bound = 1.0 / jnp.sqrt(in_f)
        w = jax.random.uniform(kw, (out_f, in_f), jnp.float32, -bound, bound)
        b = jax.random.uniform(kb, (1, out_f), jnp.float32, -bound, bound)
        return w, b

    w_aff, b_aff = linear(ks[0], ks[1], hidden_dim, input_dim)
    w_act_aff, b_act_aff = linear(ks[2], ks[3], hidden_dim, hidden_dim)
    w_action, b_action = linear(ks[4], ks[5], output_dim, hidden_dim)
    w_crit, b_crit = linear(ks[6], ks[7], hidden_dim, hidden_dim)
    w_val, b_val = linear(ks[8], ks[9], 1, hidden_dim)

    return {
        "w_aff": w_aff, "b_aff": b_aff,
        "w_act_aff": w_act_aff, "b_act_aff": b_act_aff,
        "w_action": w_action, "b_action": b_action,
        "w_crit": w_crit, "b_crit": b_crit,
        "w_val": w_val, "b_val": b_val,
    }


if __name__ == "__main__":
    input_dim, hidden_dim, output_dim = 16, 32, 4
    batch = 8

    key = jax.random.PRNGKey(0)
    k_param, k_state, k_sample = jax.random.split(key, 3)

    params = init_params(k_param, input_dim, hidden_dim, output_dim)
    state = jax.random.normal(k_state, (batch, input_dim), jnp.float32)

    probs, value = actor_critic_forward(state, params)
    probs = jax.block_until_ready(probs)
    value = jax.block_until_ready(value)

    # Reference in plain f32 JAX (eval-mode dropout).
    h_ref = jnp.maximum(state @ params["w_aff"].T + params["b_aff"], 0.0)
    cv_ref = jnp.maximum(h_ref @ params["w_crit"].T + params["b_crit"], 0.0)
    val_ref = cv_ref @ params["w_val"].T + params["b_val"]
    av_ref = jnp.maximum(h_ref @ params["w_act_aff"].T + params["b_act_aff"], 0.0)
    probs_ref = jax.nn.softmax(av_ref @ params["w_action"].T + params["b_action"], axis=-1)

    # Categorical(action_prob): sample action, record log_prob & state value (glue).
    log_probs_all = jnp.log(probs)
    action = jax.random.categorical(k_sample, log_probs_all, axis=-1)
    log_prob_action = jnp.take_along_axis(log_probs_all, action[:, None], axis=-1)[:, 0]

    action = jax.block_until_ready(action)
    log_prob_action = jax.block_until_ready(log_prob_action)

    # Sanity checks.  Softmax uses exact division -> rows sum to 1 tightly;
    # probs/value tolerances account for bf16 MXU operands.
    assert probs.shape == (batch, output_dim)
    assert value.shape == (batch, 1)
    assert action.shape == (batch,)
    assert jnp.allclose(jnp.sum(probs, axis=-1), 1.0, atol=1e-4)
    assert jnp.allclose(probs, probs_ref, atol=3e-2)
    assert jnp.allclose(value, val_ref, atol=5e-2)

    print("KERNEL_OK")
</pallas_src>

<mosaic_0001>
module attributes {stable_mosaic.version = 11 : i64} {
  func.func @_actor_critic_kernel(%arg0: i32, %arg1: memref<8x16xbf16, #tpu.memory_space<vmem>>, %arg2: memref<16x128xbf16, #tpu.memory_space<vmem>>, %arg3: memref<1x128xf32, #tpu.memory_space<vmem>>, %arg4: memref<128x256xbf16, #tpu.memory_space<vmem>>, %arg5: memref<1x256xf32, #tpu.memory_space<vmem>>, %arg6: memref<256x128xbf16, #tpu.memory_space<vmem>>, %arg7: memref<1x128xf32, #tpu.memory_space<vmem>>, %arg8: memref<8x128xf32, #tpu.memory_space<vmem>>) attributes {dimension_semantics = [#tpu.dimension_semantics<parallel>], iteration_bounds = array<i64: 1>, scalar_prefetch = 0 : i64, scratch_operands = 0 : i64, tpu.core_type = #tpu.core_type<tc>, window_params = [{transform_indices = @transform_0, window_bounds = array<i64: 8, 16>}, {pipeline_mode = #tpu.pipeline_mode<synchronous>, transform_indices = @transform_1, window_bounds = array<i64: 16, 128>}, {pipeline_mode = #tpu.pipeline_mode<synchronous>, transform_indices = @transform_2, window_bounds = array<i64: 1, 128>}, {pipeline_mode = #tpu.pipeline_mode<synchronous>, transform_indices = @transform_3, window_bounds = array<i64: 128, 256>}, {pipeline_mode = #tpu.pipeline_mode<synchronous>, transform_indices = @transform_4, window_bounds = array<i64: 1, 256>}, {pipeline_mode = #tpu.pipeline_mode<synchronous>, transform_indices = @transform_5, window_bounds = array<i64: 256, 128>}, {pipeline_mode = #tpu.pipeline_mode<synchronous>, transform_indices = @transform_6, window_bounds = array<i64: 1, 128>}, {transform_indices = @transform_7, window_bounds = array<i64: 8, 128>}]} {
    %c0 = arith.constant 0 : index
    %c0_0 = arith.constant 0 : index
    %0 = vector.load %arg1[%c0, %c0_0] : memref<8x16xbf16, #tpu.memory_space<vmem>>, vector<8x16xbf16>
    %c0_1 = arith.constant 0 : index
    %c0_2 = arith.constant 0 : index
    %1 = vector.load %arg2[%c0_1, %c0_2] : memref<16x128xbf16, #tpu.memory_space<vmem>>, vector<16x128xbf16>
    %cst = arith.constant dense<0.000000e+00> : vector<8x128xf32>
    %2 = tpu.matmul %0, %1, %cst {dimension_numbers = #tpu.dot_dimension_numbers<[1], [0], [0], [1], [0, 0, 1, 1], [], []>} : vector<8x16xbf16>, vector<16x128xbf16>, vector<8x128xf32> -> vector<8x128xf32>
    %c0_3 = arith.constant 0 : index
    %c0_4 = arith.constant 0 : index
    %3 = vector.load %arg3[%c0_3, %c0_4] : memref<1x128xf32, #tpu.memory_space<vmem>>, vector<1x128xf32>
    %4 = vector.broadcast %3 : vector<1x128xf32> to vector<8x128xf32>
    %5 = arith.addf %2, %4 : vector<8x128xf32>
    %cst_5 = arith.constant 0.000000e+00 : f32
    %6 = vector.broadcast %cst_5 : f32 to vector<8x128xf32>
    %7 = arith.maximumf %5, %6 : vector<8x128xf32>
    %8 = arith.truncf %7 : vector<8x128xf32> to vector<8x128xbf16>
    %c0_6 = arith.constant 0 : index
    %c0_7 = arith.constant 0 : index
    %9 = vector.load %arg4[%c0_6, %c0_7] : memref<128x256xbf16, #tpu.memory_space<vmem>>, vector<128x256xbf16>
    %cst_8 = arith.constant dense<0.000000e+00> : vector<8x256xf32>
    %10 = tpu.matmul %8, %9, %cst_8 {dimension_numbers = #tpu.dot_dimension_numbers<[1], [0], [0], [1], [0, 0, 1, 1], [], []>} : vector<8x128xbf16>, vector<128x256xbf16>, vector<8x256xf32> -> vector<8x256xf32>
    %c0_9 = arith.constant 0 : index
    %c0_10 = arith.constant 0 : index
    %11 = vector.load %arg5[%c0_9, %c0_10] : memref<1x256xf32, #tpu.memory_space<vmem>>, vector<1x256xf32>
    %12 = vector.broadcast %11 : vector<1x256xf32> to vector<8x256xf32>
    %13 = arith.addf %10, %12 : vector<8x256xf32>
    %cst_11 = arith.constant 0.000000e+00 : f32
    %14 = vector.broadcast %cst_11 : f32 to vector<8x256xf32>
    %15 = arith.maximumf %13, %14 : vector<8x256xf32>
    %16 = arith.truncf %15 : vector<8x256xf32> to vector<8x256xbf16>
    %c0_12 = arith.constant 0 : index
    %c0_13 = arith.constant 0 : index
    %17 = vector.load %arg6[%c0_12, %c0_13] : memref<256x128xbf16, #tpu.memory_space<vmem>>, vector<256x128xbf16>
    %cst_14 = arith.constant dense<0.000000e+00> : vector<8x128xf32>
    %18 = tpu.matmul %16, %17, %cst_14 {dimension_numbers = #tpu.dot_dimension_numbers<[1], [0], [0], [1], [0, 0, 1, 1], [], []>} : vector<8x256xbf16>, vector<256x128xbf16>, vector<8x128xf32> -> vector<8x128xf32>
    %c0_15 = arith.constant 0 : index
    %c0_16 = arith.constant 0 : index
    %19 = vector.load %arg7[%c0_15, %c0_16] : memref<1x128xf32, #tpu.memory_space<vmem>>, vector<1x128xf32>
    %20 = vector.broadcast %19 : vector<1x128xf32> to vector<8x128xf32>
    %21 = arith.addf %18, %20 : vector<8x128xf32>
    %22 = tpu.iota {dimensions = array<i32: 1>} : vector<8x128xi32>
    %c4_i32 = arith.constant 4 : i32
    %23 = vector.broadcast %c4_i32 : i32 to vector<8x128xi32>
    %24 = arith.cmpi slt, %22, %23 : vector<8x128xi32>
    %cst_17 = arith.constant -1.000000e+30 : f32
    %25 = vector.broadcast %cst_17 : f32 to vector<8x128xf32>
    %26 = arith.select %24, %21, %25 : vector<8x128xi1>, vector<8x128xf32>
    %cst_18 = arith.constant dense<0xFF800000> : vector<8xf32>
    %27 = vector.multi_reduction <maximumf>, %26, %cst_18 [1] : vector<8x128xf32> to vector<8xf32>
    %28 = vector.shape_cast %27 : vector<8xf32> to vector<8x1xf32>
    %29 = vector.broadcast %28 : vector<8x1xf32> to vector<8x128xf32>
    %30 = arith.subf %26, %29 : vector<8x128xf32>
    %31 = math.exp %30 : vector<8x128xf32>
    %cst_19 = arith.constant 0.000000e+00 : f32
    %32 = vector.broadcast %cst_19 : f32 to vector<8x128xf32>
    %33 = arith.select %24, %31, %32 : vector<8x128xi1>, vector<8x128xf32>
    %cst_20 = arith.constant dense<0.000000e+00> : vector<8xf32>
    %34 = vector.multi_reduction <add>, %33, %cst_20 [1] : vector<8x128xf32> to vector<8xf32>
    %35 = vector.shape_cast %34 : vector<8xf32> to vector<8x1xf32>
    %36 = vector.broadcast %35 : vector<8x1xf32> to vector<8x128xf32>
    %37 = arith.divf %33, %36 : vector<8x128xf32>
    %38 = arith.select %24, %37, %21 : vector<8x128xi1>, vector<8x128xf32>
    %c0_21 = arith.constant 0 : index
    %c0_22 = arith.constant 0 : index
    %39 = vector.load %arg8[%c0_21, %c0_22] : memref<8x128xf32, #tpu.memory_space<vmem>>, vector<8x128xf32>
    tpu.vector_store %arg8[%c0_21, %c0_22], %38 {strides = array<i32>} : memref<8x128xf32, #tpu.memory_space<vmem>>, vector<8x128xf32>,
    return
  }
  func.func @transform_0(%arg0: i32) -> (i32, i32) {
    %c0_i32 = arith.constant 0 : i32
    %c0_i32_0 = arith.constant 0 : i32
    return %arg0, %c0_i32 : i32, i32
  }
  func.func @transform_1(%arg0: i32) -> (i32, i32) {
    %c0_i32 = arith.constant 0 : i32
    %c0_i32_0 = arith.constant 0 : i32
    %c0_i32_1 = arith.constant 0 : i32
    return %c0_i32, %c0_i32_0 : i32, i32
  }
  func.func @transform_2(%arg0: i32) -> (i32, i32) {
    %c0_i32 = arith.constant 0 : i32
    %c0_i32_0 = arith.constant 0 : i32
    %c0_i32_1 = arith.constant 0 : i32
    return %c0_i32, %c0_i32_0 : i32, i32
  }
  func.func @transform_3(%arg0: i32) -> (i32, i32) {
    %c0_i32 = arith.constant 0 : i32
    %c0_i32_0 = arith.constant 0 : i32
    %c0_i32_1 = arith.constant 0 : i32
    return %c0_i32, %c0_i32_0 : i32, i32
  }
  func.func @transform_4(%arg0: i32) -> (i32, i32) {
    %c0_i32 = arith.constant 0 : i32
    %c0_i32_0 = arith.constant 0 : i32
    %c0_i32_1 = arith.constant 0 : i32
    return %c0_i32, %c0_i32_0 : i32, i32
  }
  func.func @transform_5(%arg0: i32) -> (i32, i32) {
    %c0_i32 = arith.constant 0 : i32
    %c0_i32_0 = arith.constant 0 : i32
    %c0_i32_1 = arith.constant 0 : i32
    return %c0_i32, %c0_i32_0 : i32, i32
  }
  func.func @transform_6(%arg0: i32) -> (i32, i32) {
    %c0_i32 = arith.constant 0 : i32
    %c0_i32_0 = arith.constant 0 : i32
    %c0_i32_1 = arith.constant 0 : i32
    return %c0_i32, %c0_i32_0 : i32, i32
  }
  func.func @transform_7(%arg0: i32) -> (i32, i32) {
    %c0_i32 = arith.constant 0 : i32
    %c0_i32_0 = arith.constant 0 : i32
    return %arg0, %c0_i32 : i32, i32
  }
}

</mosaic_0001>

<llo_original>
// kernel: tpu_custom_call.1
$region0: #{tpu_custom_call.1}
  #allocation0 [shape = 'u32[]', space=smem, size = 0x4, offset = 0x4, fixed_abs, tag = 'smem constant byte address 0x4 - core index']
  #allocation1 [shape = 'u32[144,128]{1,0:T(1,128)}', space=vmem, size = 0x12000, scoped, tag = 'internal scratch']
  %s0 = inlined_call_operand.hbm [shape: bf16[8,16], index: 0, kind: input, shape index: {}]
  %s1 = inlined_call_operand.hbm [shape: bf16[16,128], index: 1, kind: input, shape index: {}]
  %s2 = inlined_call_operand.vmem [shape: f32[1,128], index: 2, kind: input, shape index: {}]
  %s3 = inlined_call_operand.hbm [shape: bf16[128,256], index: 3, kind: input, shape index: {}]
  %s4 = inlined_call_operand.vmem [shape: f32[1,256], index: 4, kind: input, shape index: {}]
  %s5 = inlined_call_operand.hbm [shape: bf16[256,128], index: 5, kind: input, shape index: {}]
  %s6 = inlined_call_operand.vmem [shape: f32[1,128], index: 6, kind: input, shape index: {}]
  %s7 = inlined_call_operand.hbm [shape: f32[8,128], index: 7, kind: output, shape index: {}]
  %s8 = sld [smem:[#allocation0]]
  $region54: #{tpu_custom_call.1} parent=0
    _
  %s10 = ssub.s32 1, %s8
  %s11 = scalar_select 0, %s10, %s8
  $region1: #{tpu_custom_call.1} parent=0
    #allocation2 [shape = 'u8[2048]{0}', space=vmem, size = 0x800, scoped, tag = 'input window, operand 0, single buffered']
    #allocation3 [shape = 's32[1]{0}', space=sflag, size = 0x4, scoped, tag = 'scoped memory for tpu_custom_call.1']
    #allocation4 [shape = 's32[1]{0}', space=sflag, size = 0x4, scoped, tag = 'scoped memory for tpu_custom_call.1']
    #allocation5 [shape = 'u8[4096]{0}', space=vmem, size = 0x1000, scoped, tag = 'input window, operand 1, single buffered']
    #allocation6 [shape = 's32[1]{0}', space=sflag, size = 0x4, scoped, tag = 'scoped memory for tpu_custom_call.1']
    #allocation7 [shape = 'u8[65536]{0}', space=vmem, size = 0x10000, scoped, tag = 'input window, operand 3, single buffered']
    #allocation8 [shape = 'u8[65536]{0}', space=vmem, size = 0x10000, scoped, tag = 'input window, operand 5, single buffered']
    #allocation9 [shape = 's32[1]{0}', space=sflag, size = 0x4, scoped, tag = 'scoped memory for tpu_custom_call.1']
    #allocation10 [shape = 'u8[4096]{0}', space=vmem, size = 0x1000, scoped, tag = 'output window, operand 0, single buffered']
    %12 = vsyncpa [#allocation3], 0
    %13 = vsyncpa [#allocation6], 0
    %14 = vsyncpa [#allocation9], 0
    %15 = vsyncpa [#allocation4], 0
    // Predicated region
    $region2: #{tpu_custom_call.1} parent=1 // pred_check
      _
    $region3: #{tpu_custom_call.1} parent=1 // pred_check_branch
      %17 = sbr.rel (0) target = $region5
    $region4: #{tpu_custom_call.1} parent=1 // pred_region
      %s19 = ssub.s32 64, 64
      %20 = vsyncadd [#allocation3], %s19
      %s22 = sshll.u32 [#allocation2], 4
      %s23 = int_to_ptr.vmem [resolvable:$true] %s22
      %25 = dma.hbm_to_vmem [thread:$0]  %s0, 64, %s23, [#allocation3]
    $region5: #{tpu_custom_call.1} parent=1 // pred_fallthru
      _
    // Predicated region
    $region6: #{tpu_custom_call.1} parent=1 // pred_check
      _
    $region7: #{tpu_custom_call.1} parent=1 // pred_check_branch
      %27 = sbr.rel (0) target = $region9
    $region8: #{tpu_custom_call.1} parent=1 // pred_region
      %s29 = ssub.s32 128, 128
      %30 = vsyncadd [#allocation6], %s29
      %s31 = sshll.u32 [#allocation5], 4
      %s32 = int_to_ptr.vmem [resolvable:$true] %s31
      %37 = dma.hbm_to_vmem [thread:$0]  %s1, 128, %s32, [#allocation6], 64, 64, 4
    $region9: #{tpu_custom_call.1} parent=1 // pred_fallthru
      _
    // Predicated region
    $region10: #{tpu_custom_call.1} parent=1 // pred_check
      _
    $region11: #{tpu_custom_call.1} parent=1 // pred_check_branch
      %39 = sbr.rel (0) target = $region13
    $region12: #{tpu_custom_call.1} parent=1 // pred_region
      _
    $region13: #{tpu_custom_call.1} parent=1 // pred_fallthru
      _
    // Predicated region
    $region14: #{tpu_custom_call.1} parent=1 // pred_check
      _
    $region15: #{tpu_custom_call.1} parent=1 // pred_check_branch
      %41 = sbr.rel (0) target = $region17
    $region16: #{tpu_custom_call.1} parent=1 // pred_region
      %s43 = ssub.s32 2048, 2048
      %44 = vsyncadd [#allocation6], %s43
      %s45 = sshll.u32 [#allocation7], 4
      %s46 = int_to_ptr.vmem [resolvable:$true] %s45
      %51 = dma.hbm_to_vmem [thread:$0]  %s3, 2048, %s46, [#allocation6], 128, 128, 8
    $region17: #{tpu_custom_call.1} parent=1 // pred_fallthru
      _
    // Predicated region
    $region18: #{tpu_custom_call.1} parent=1 // pred_check
      _
    $region19: #{tpu_custom_call.1} parent=1 // pred_check_branch
      %53 = sbr.rel (0) target = $region21
    $region20: #{tpu_custom_call.1} parent=1 // pred_region
      _
    $region21: #{tpu_custom_call.1} parent=1 // pred_fallthru
      _
    // Predicated region
    $region22: #{tpu_custom_call.1} parent=1 // pred_check
      _
    $region23: #{tpu_custom_call.1} parent=1 // pred_check_branch
      %55 = sbr.rel (0) target = $region25
    $region24: #{tpu_custom_call.1} parent=1 // pred_region
      %s57 = ssub.s32 2048, 2048
      %58 = vsyncadd [#allocation9], %s57
      %s59 = sshll.u32 [#allocation8], 4
      %s60 = int_to_ptr.vmem [resolvable:$true] %s59
      %65 = dma.hbm_to_vmem [thread:$0]  %s5, 2048, %s60, [#allocation9], 64, 64, 4
    $region25: #{tpu_custom_call.1} parent=1 // pred_fallthru
      _
    // Predicated region
    $region26: #{tpu_custom_call.1} parent=1 // pred_check
      _
    $region27: #{tpu_custom_call.1} parent=1 // pred_check_branch
      %67 = sbr.rel (0) target = $region29
    $region28: #{tpu_custom_call.1} parent=1 // pred_region
      _
    $region29: #{tpu_custom_call.1} parent=1 // pred_fallthru
      _
    // Predicated region
    $region30: #{tpu_custom_call.1} parent=1 // pred_check
      _
    $region31: #{tpu_custom_call.1} parent=1 // pred_check_branch
      %69 = sbr.rel (0) target = $region33
    $region32: #{tpu_custom_call.1} parent=1 // pred_region
      %70 = dma.done [#allocation3], 64
    $region33: #{tpu_custom_call.1} parent=1 // pred_fallthru
      _
    // Predicated region
    $region34: #{tpu_custom_call.1} parent=1 // pred_check
      _
    $region35: #{tpu_custom_call.1} parent=1 // pred_check_branch
      %72 = sbr.rel (0) target = $region37
    $region36: #{tpu_custom_call.1} parent=1 // pred_region
      %73 = dma.done [#allocation6], 128
    $region37: #{tpu_custom_call.1} parent=1 // pred_fallthru
      _
    // Predicated region
    $region38: #{tpu_custom_call.1} parent=1 // pred_check
      _
    $region39: #{tpu_custom_call.1} parent=1 // pred_check_branch
      %75 = sbr.rel (0) target = $region41
    $region40: #{tpu_custom_call.1} parent=1 // pred_region
      %76 = dma.done [#allocation6], 2048
    $region41: #{tpu_custom_call.1} parent=1 // pred_fallthru
      _
    // Predicated region
    $region42: #{tpu_custom_call.1} parent=1 // pred_check
      _
    $region43: #{tpu_custom_call.1} parent=1 // pred_check_branch
      %78 = sbr.rel (0) target = $region45
    $region44: #{tpu_custom_call.1} parent=1 // pred_region
      %79 = dma.done [#allocation9], 2048
    $region45: #{tpu_custom_call.1} parent=1 // pred_fallthru
      _
    %v81 = vld [vmem:[#allocation2] sm:$0xf]
    %v82 = vld [vmem:[#allocation5] sm:$0xf]
    %v83 = vld [vmem:[#allocation5 + $0x4] sm:$0xf]
    %v84 = vld [vmem:[%s2] sm:$0x1]
    %v86 = vlaneseq
    %v87 = vshrl.u32 %v86, 7
    %v88 = vsub.s32 0, %v87
    %v89 = vrot.slane %v84, %v88
    %v93 = vunpack.c.l.b16 %v82
    %v94 = vunpack.c.l.b16 %v83
    %v95 = vpack.c.b16 %v94, %v93
    %vm97 = vcmask 130048
    %v99 = vsel %vm97, %v81, 0
    %101 = vmatprep.subr.bf16.mxu0 0
    %102 = vmatpush1.bf16.msra.mxu0 %v95
    %103 = vmatprep.subr.bf16.mxu0 0
    %104 = vmatpush1.bf16.msra.mxu0 0
    %105 = vmatprep.subr.bf16.mxu0 0
    %106 = vmatpush1.bf16.msra.mxu0 0
    %107 = vmatprep.subr.bf16.mxu0 0
    %108 = vmatpush1.bf16.msra.mxu0 0
    %109 = vmatprep.subr.bf16.mxu0 0
    %110 = vmatpush1.bf16.msra.mxu0 0
    %111 = vmatprep.subr.bf16.mxu0 0
    %112 = vmatpush1.bf16.msra.mxu0 0
    %113 = vmatprep.subr.bf16.mxu0 0
    %114 = vmatpush1.bf16.msra.mxu0 0
    %115 = vmatprep.subr.bf16.mxu0 0
    %116 = vmatpush1.bf16.msra.mxu0 0
    %117 = vmatprep.subr.bf16.mxu0 0
    %118 = vmatpush1.bf16.msra.mxu0 0
    %119 = vmatprep.subr.bf16.mxu0 0
    %120 = vmatpush1.bf16.msra.mxu0 0
    %121 = vmatprep.subr.bf16.mxu0 0
    %122 = vmatpush1.bf16.msra.mxu0 0
    %123 = vmatprep.subr.bf16.mxu0 0
    %124 = vmatpush1.bf16.msra.mxu0 0
    %125 = vmatprep.subr.bf16.mxu0 0
    %126 = vmatpush1.bf16.msra.mxu0 0
    %127 = vmatprep.subr.bf16.mxu0 0
    %128 = vmatpush1.bf16.msra.mxu0 0
    %129 = vmatprep.subr.bf16.mxu0 0
    %130 = vmatpush1.bf16.msra.mxu0 0
    %131 = vmatprep.subr.bf16.mxu0 0
    %132 = vmatpush1.bf16.msra.mxu0 0
    %133 = vmatprep.mubr.bf16.mxu0 0
    %134 = vmatmul.mubr.bf16.gmra.mrb[0].mxu0 %v99
    %v135 = vpop.f32.mrb[0].mxu0
    %v136 = vadd.f32 %v89, %v135
    %v137 = vpop.f32.mrb[0].mxu0
    %v138 = vpop.f32.mrb[0].mxu0
    %v139 = vpop.f32.mrb[0].mxu0
    %140 = vdwg.mxu0
    %v141 = vmax.f32 %v136, 0.0
    %v142 = vpack.c.bf16 %v141, %v141
    %v143 = vld [vmem:[#allocation7] sm:$0xff]
    %v144 = vld [vmem:[#allocation7 + $0x8] sm:$0xff]
    %v145 = vld [vmem:[#allocation7 + $0x10] sm:$0xff]
    %v146 = vld [vmem:[#allocation7 + $0x18] sm:$0xff]
    %v147 = vld [vmem:[#allocation7 + $0x20] sm:$0xff]
    %v148 = vld [vmem:[#allocation7 + $0x28] sm:$0xff]
    %v149 = vld [vmem:[#allocation7 + $0x30] sm:$0xff]
    %v150 = vld [vmem:[#allocation7 + $0x38] sm:$0xff]
    %v151 = vld [vmem:[#allocation7 + $0x40] sm:$0xff]
    %v152 = vld [vmem:[#allocation7 + $0x48] sm:$0xff]
    %v153 = vld [vmem:[#allocation7 + $0x50] sm:$0xff]
    %v154 = vld [vmem:[#allocation7 + $0x58] sm:$0xff]
    %v155 = vld [vmem:[#allocation7 + $0x60] sm:$0xff]
    %v156 = vld [vmem:[#allocation7 + $0x68] sm:$0xff]
    %v157 = vld [vmem:[#allocation7 + $0x70] sm:$0xff]
    %v158 = vld [vmem:[#allocation7 + $0x78] sm:$0xff]
    %v159 = vld [vmem:[%s4] sm:$0x3]
    %v161 = vlaneseq
    %v162 = vshrl.u32 %v161, 7
    %v163 = vsub.s32 0, %v162
    %v164 = vrot.slane %v159, %v163
    %v165 = vlaneseq
    %v166 = vshrl.u32 %v165, 7
    %v167 = vsub.s32 1, %v166
    %v168 = vrot.slane %v159, %v167
    %v187 = vunpack.c.l.b16 %v143
    %v188 = vunpack.c.h.b16 %v143
    %v189 = vunpack.c.l.b16 %v144
    %v190 = vunpack.c.h.b16 %v144
    %v191 = vunpack.c.l.b16 %v145
    %v192 = vunpack.c.h.b16 %v145
    %v193 = vunpack.c.l.b16 %v146
    %v194 = vunpack.c.h.b16 %v146
    %v195 = vunpack.c.l.b16 %v147
    %v196 = vunpack.c.h.b16 %v147
    %v197 = vunpack.c.l.b16 %v148
    %v198 = vunpack.c.h.b16 %v148
    %v199 = vunpack.c.l.b16 %v149
    %v200 = vunpack.c.h.b16 %v149
    %v201 = vunpack.c.l.b16 %v150
    %v202 = vunpack.c.h.b16 %v150
    %v203 = vunpack.c.l.b16 %v151
    %v204 = vunpack.c.h.b16 %v151
    %v205 = vunpack.c.l.b16 %v152
    %v206 = vunpack.c.h.b16 %v152
    %v207 = vunpack.c.l.b16 %v153
    %v208 = vunpack.c.h.b16 %v153
    %v209 = vunpack.c.l.b16 %v154
    %v210 = vunpack.c.h.b16 %v154
    %v211 = vunpack.c.l.b16 %v155
    %v212 = vunpack.c.h.b16 %v155
    %v213 = vunpack.c.l.b16 %v156
    %v214 = vunpack.c.h.b16 %v156
    %v215 = vunpack.c.l.b16 %v157
    %v216 = vunpack.c.h.b16 %v157
    %v217 = vunpack.c.l.b16 %v158
    %v218 = vunpack.c.h.b16 %v158
    %v219 = vpack.c.b16 %v189, %v187
    %v220 = vpack.c.b16 %v190, %v188
    %v221 = vpack.c.b16 %v193, %v191
    %v222 = vpack.c.b16 %v194, %v192
    %v223 = vpack.c.b16 %v197, %v195
    %v224 = vpack.c.b16 %v198, %v196
    %v225 = vpack.c.b16 %v201, %v199
    %v226 = vpack.c.b16 %v202, %v200
    %v227 = vpack.c.b16 %v205, %v203
    %v228 = vpack.c.b16 %v206, %v204
    %v229 = vpack.c.b16 %v209, %v207
    %v230 = vpack.c.b16 %v210, %v208
    %v231 = vpack.c.b16 %v213, %v211
    %v232 = vpack.c.b16 %v214, %v212
    %v233 = vpack.c.b16 %v217, %v215
    %v234 = vpack.c.b16 %v218, %v216
    %251 = vmatprep.subr.bf16.mxu0 %v220
    %252 = vmatpush1.bf16.msra.mxu0 %v219
    %253 = vmatprep.subr.bf16.mxu0 %v222
    %254 = vmatpush1.bf16.msra.mxu0 %v221
    %255 = vmatprep.subr.bf16.mxu0 %v224
    %256 = vmatpush1.bf16.msra.mxu0 %v223
    %257 = vmatprep.subr.bf16.mxu0 %v226
    %258 = vmatpush1.bf16.msra.mxu0 %v225
    %259 = vmatprep.subr.bf16.mxu0 %v228
    %260 = vmatpush1.bf16.msra.mxu0 %v227
    %261 = vmatprep.subr.bf16.mxu0 %v230
    %262 = vmatpush1.bf16.msra.mxu0 %v229
    %263 = vmatprep.subr.bf16.mxu0 %v232
    %264 = vmatpush1.bf16.msra.mxu0 %v231
    %265 = vmatprep.subr.bf16.mxu0 %v234
    %266 = vmatpush1.bf16.msra.mxu0 %v233
    %267 = vmatprep.subr.bf16.mxu0 0
    %268 = vmatpush1.bf16.msra.mxu0 0
    %269 = vmatprep.subr.bf16.mxu0 0
    %270 = vmatpush1.bf16.msra.mxu0 0
    %271 = vmatprep.subr.bf16.mxu0 0
    %272 = vmatpush1.bf16.msra.mxu0 0
    %273 = vmatprep.subr.bf16.mxu0 0
    %274 = vmatpush1.bf16.msra.mxu0 0
    %275 = vmatprep.subr.bf16.mxu0 0
    %276 = vmatpush1.bf16.msra.mxu0 0
    %277 = vmatprep.subr.bf16.mxu0 0
    %278 = vmatpush1.bf16.msra.mxu0 0
    %279 = vmatprep.subr.bf16.mxu0 0
    %280 = vmatpush1.bf16.msra.mxu0 0
    %281 = vmatprep.subr.bf16.mxu0 0
    %282 = vmatpush1.bf16.msra.mxu0 0
    %283 = vmatprep.mubr.bf16.mxu0 0
    %284 = vmatmul.mubr.bf16.gmra.mrb[0].mxu0 %v142
    %v285 = vpop.f32.mrb[0].mxu0
    %v286 = vadd.f32 %v164, %v285
    %v287 = vpop.f32.mrb[0].mxu0
    %v288 = vadd.f32 %v168, %v287
    %v289 = vpop.f32.mrb[0].mxu0
    %v290 = vpop.f32.mrb[0].mxu0
    %291 = vdwg.mxu0
    %v292 = vmax.f32 %v286, 0.0
    %v293 = vmax.f32 %v288, 0.0
    %v294 = vpack.c.bf16 %v292, %v292
    %v295 = vpack.c.bf16 %v293, %v293
    %v296 = vld [vmem:[#allocation8] sm:$0xf]
    %v297 = vld [vmem:[#allocation8 + $0x4] sm:$0xf]
    %v298 = vld [vmem:[#allocation8 + $0x8] sm:$0xf]
    %v299 = vld [vmem:[#allocation8 + $0xc] sm:$0xf]
    %v300 = vld [vmem:[#allocation8 + $0x10] sm:$0xf]
    %v301 = vld [vmem:[#allocation8 + $0x14] sm:$0xf]
    %v302 = vld [vmem:[#allocation8 + $0x18] sm:$0xf]
    %v303 = vld [vmem:[#allocation8 + $0x1c] sm:$0xf]
    %v304 = vld [vmem:[#allocation8 + $0x20] sm:$0xf]
    %v305 = vld [vmem:[#allocation8 + $0x24] sm:$0xf]
    %v306 = vld [vmem:[#allocation8 + $0x28] sm:$0xf]
    %v307 = vld [vmem:[#allocation8 + $0x2c] sm:$0xf]
    %v308 = vld [vmem:[#allocation8 + $0x30] sm:$0xf]
    %v309 = vld [vmem:[#allocation8 + $0x34] sm:$0xf]
    %v310 = vld [vmem:[#allocation8 + $0x38] sm:$0xf]
    %v311 = vld [vmem:[#allocation8 + $0x3c] sm:$0xf]
    %v312 = vld [vmem:[#allocation8 + $0x40] sm:$0xf]
    %v313 = vld [vmem:[#allocation8 + $0x44] sm:$0xf]
    %v314 = vld [vmem:[#allocation8 + $0x48] sm:$0xf]
    %v315 = vld [vmem:[#allocation8 + $0x4c] sm:$0xf]
    %v316 = vld [vmem:[#allocation8 + $0x50] sm:$0xf]
    %v317 = vld [vmem:[#allocation8 + $0x54] sm:$0xf]
    %v318 = vld [vmem:[#allocation8 + $0x58] sm:$0xf]
    %v319 = vld [vmem:[#allocation8 + $0x5c] sm:$0xf]
    %v320 = vld [vmem:[#allocation8 + $0x60] sm:$0xf]
    %v321 = vld [vmem:[#allocation8 + $0x64] sm:$0xf]
    %v322 = vld [vmem:[#allocation8 + $0x68] sm:$0xf]
    %v323 = vld [vmem:[#allocation8 + $0x6c] sm:$0xf]
    %v324 = vld [vmem:[#allocation8 + $0x70] sm:$0xf]
    %v325 = vld [vmem:[#allocation8 + $0x74] sm:$0xf]
    %v326 = vld [vmem:[#allocation8 + $0x78] sm:$0xf]
    %v327 = vld [vmem:[#allocation8 + $0x7c] sm:$0xf]
    %v328 = vld [vmem:[%s6] sm:$0x1]
    %v330 = vlaneseq
    %v331 = vshrl.u32 %v330, 7
    %v332 = vsub.s32 0, %v331
    %v333 = vrot.slane %v328, %v332
    %v367 = vunpack.c.l.b16 %v296
    %v368 = vunpack.c.l.b16 %v297
    %v369 = vunpack.c.l.b16 %v298
    %v370 = vunpack.c.l.b16 %v299
    %v371 = vunpack.c.l.b16 %v300
    %v372 = vunpack.c.l.b16 %v301
    %v373 = vunpack.c.l.b16 %v302
    %v374 = vunpack.c.l.b16 %v303
    %v375 = vunpack.c.l.b16 %v304
    %v376 = vunpack.c.l.b16 %v305
    %v377 = vunpack.c.l.b16 %v306
    %v378 = vunpack.c.l.b16 %v307
    %v379 = vunpack.c.l.b16 %v308
    %v380 = vunpack.c.l.b16 %v309
    %v381 = vunpack.c.l.b16 %v310
    %v382 = vunpack.c.l.b16 %v311
    %v383 = vunpack.c.l.b16 %v312
    %v384 = vunpack.c.l.b16 %v313
    %v385 = vunpack.c.l.b16 %v314
    %v386 = vunpack.c.l.b16 %v315
    %v387 = vunpack.c.l.b16 %v316
    %v388 = vunpack.c.l.b16 %v317
    %v389 = vunpack.c.l.b16 %v318
    %v390 = vunpack.c.l.b16 %v319
    %v391 = vunpack.c.l.b16 %v320
    %v392 = vunpack.c.l.b16 %v321
    %v393 = vunpack.c.l.b16 %v322
    %v394 = vunpack.c.l.b16 %v323
    %v395 = vunpack.c.l.b16 %v324
    %v396 = vunpack.c.l.b16 %v325
    %v397 = vunpack.c.l.b16 %v326
    %v398 = vunpack.c.l.b16 %v327
    %v399 = vpack.c.b16 %v368, %v367
    %v400 = vpack.c.b16 %v370, %v369
    %v401 = vpack.c.b16 %v372, %v371
    %v402 = vpack.c.b16 %v374, %v373
    %v403 = vpack.c.b16 %v376, %v375
    %v404 = vpack.c.b16 %v378, %v377
    %v405 = vpack.c.b16 %v380, %v379
    %v406 = vpack.c.b16 %v382, %v381
    %v407 = vpack.c.b16 %v384, %v383
    %v408 = vpack.c.b16 %v386, %v385
    %v409 = vpack.c.b16 %v388, %v387
    %v410 = vpack.c.b16 %v390, %v389
    %v411 = vpack.c.b16 %v392, %v391
    %v412 = vpack.c.b16 %v394, %v393
    %v413 = vpack.c.b16 %v396, %v395
    %v414 = vpack.c.b16 %v398, %v397
    %431 = vmatprep.subr.bf16.mxu0 0
    %432 = vmatpush1.bf16.msra.mxu0 %v399
    %433 = vmatprep.subr.bf16.mxu0 0
    %434 = vmatpush1.bf16.msra.mxu0 %v400
    %435 = vmatprep.subr.bf16.mxu0 0
    %436 = vmatpush1.bf16.msra.mxu0 %v401
    %437 = vmatprep.subr.bf16.mxu0 0
    %438 = vmatpush1.bf16.msra.mxu0 %v402
    %439 = vmatprep.subr.bf16.mxu0 0
    %440 = vmatpush1.bf16.msra.mxu0 %v403
    %441 = vmatprep.subr.bf16.mxu0 0
    %442 = vmatpush1.bf16.msra.mxu0 %v404
    %443 = vmatprep.subr.bf16.mxu0 0
    %444 = vmatpush1.bf16.msra.mxu0 %v405
    %445 = vmatprep.subr.bf16.mxu0 0
    %446 = vmatpush1.bf16.msra.mxu0 %v406
    %447 = vmatprep.subr.bf16.mxu0 0
    %448 = vmatpush1.bf16.msra.mxu0 %v407
    %449 = vmatprep.subr.bf16.mxu0 0
    %450 = vmatpush1.bf16.msra.mxu0 %v408
    %451 = vmatprep.subr.bf16.mxu0 0
    %452 = vmatpush1.bf16.msra.mxu0 %v409
    %453 = vmatprep.subr.bf16.mxu0 0
    %454 = vmatpush1.bf16.msra.mxu0 %v410
    %455 = vmatprep.subr.bf16.mxu0 0
    %456 = vmatpush1.bf16.msra.mxu0 %v411
    %457 = vmatprep.subr.bf16.mxu0 0
    %458 = vmatpush1.bf16.msra.mxu0 %v412
    %459 = vmatprep.subr.bf16.mxu0 0
    %460 = vmatpush1.bf16.msra.mxu0 %v413
    %461 = vmatprep.subr.bf16.mxu0 0
    %462 = vmatpush1.bf16.msra.mxu0 %v414
    %463 = vmatprep.mubr.bf16.mxu0 %v295
    %464 = vmatmul.mubr.bf16.gmra.mrb[0].mxu0 %v294
    %v465 = vpop.f32.mrb[0].mxu0
    %v466 = vadd.f32 %v333, %v465
    %v467 = vpop.f32.mrb[0].mxu0
    %v468 = vpop.f32.mrb[0].mxu0
    %v469 = vpop.f32.mrb[0].mxu0
    %470 = vdwg.mxu0
    %v471 = vlaneseq
    %v472 = vand.u32 %v471, 127
    %vm473 = vcmp.lt.s32.totalorder %v472, 4
    %v474 = vsel %vm473, %v466, -1e+30
    %475 = vmax.xlane.f32.xlu0 %v474
    %v476 = vpop.xlane.xlu0 %475
    %v477 = vsub.f32 %v474, %v476
    %v478 = vmul.f32 %v477, 1.442695
    %v479 = vpow.pop %v478
    %v480 = vsel %vm473, %v479, 0.0
    %481 = vadd.xlane.f32.xlu0 %v480
    %v482 = vpop.xlane.xlu0 %481
    %v483 = vrcp.pop %v482
    %v484 = vmul.f32 %v480, %v483
    %v485 = vsel %vm473, %v484, %v466
    %486 = vst [vmem:[#allocation10] sm:$0xff] %v485
    // Predicated region
    $region46: #{tpu_custom_call.1} parent=1 // pred_check
      _
    $region47: #{tpu_custom_call.1} parent=1 // pred_check_branch
      %488 = sbr.rel (0) target = $region49
    $region48: #{tpu_custom_call.1} parent=1 // pred_region
      %s490 = ssub.s32 128, 128
      %491 = vsyncadd [#allocation4], %s490
      %s493 = sshll.u32 [#allocation10], 4
      %s494 = int_to_ptr.vmem [resolvable:$true] %s493
      %496 = dma.vmem_to_hbm [thread:$0]  %s494, 128, %s7, [#allocation4]
    $region49: #{tpu_custom_call.1} parent=1 // pred_fallthru
      _
    // Predicated region
    $region50: #{tpu_custom_call.1} parent=1 // pred_check
      _
    $region51: #{tpu_custom_call.1} parent=1 // pred_check_branch
      %498 = sbr.rel (0) target = $region53
    $region52: #{tpu_custom_call.1} parent=1 // pred_region
      %499 = dma.done [#allocation4], 128
    $region53: #{tpu_custom_call.1} parent=1 // pred_fallthru
      _
    %500 = vsyncpa [#allocation3], 1
    %501 = vsyncpa [#allocation6], 1
    %502 = vsyncpa [#allocation9], 1
    %503 = vsyncpa [#allocation4], 1

</llo_original>
